<compile_context>
chip_gen: v6e
topology: v6e:2x2x1
jax: 0.10.0
libtpu: 0.0.40
codegen_flags: <defaults>
</compile_context>

<pallas_src>
import math

import jax
import jax.numpy as jnp
import numpy as np
from jax.experimental import pallas as pl
from jax.experimental.pallas import tpu as pltpu

HIDDEN = 64


def _reorder_gates(w):
    """PyTorch LSTM gate order along the leading 4H axis is (i, f, g, o).
    Reorder to (i, f, o, g) so the kernel applies one wide sigmoid to the
    first 3H columns and one tanh to the last H columns."""
    i, f, g, o = jnp.split(w, 4, axis=0)
    return jnp.concatenate([i, f, o, g], axis=0)


def _make_lstm_chunk_kernel(tt, hidden, unroll):
    def kernel(gx_ref, whh_ref, h_out_ref, h_scr, c_scr):
        """Recurrent part only: one grid step = `tt` LSTM timesteps.

        gx_ref    : (tt, Bp, 4H)  precomputed x@W_ih^T + b, gate order i|f|o|g
        whh_ref   : (H, 4H)       hidden->gates weight (transposed, reordered)
        h_out_ref : (tt, Bp, H)   hidden states for this chunk
        h_scr     : (Bp, H)       recurrent hidden state (persists across grid)
        c_scr     : (Bp, H)       recurrent cell state   (persists across grid)
        """
        H = hidden

        @pl.when(pl.program_id(0) == 0)
        def _():
            h_scr[...] = jnp.zeros_like(h_scr)
            c_scr[...] = jnp.zeros_like(c_scr)

        whh = whh_ref[...]  # (H, 4H), resident for the whole chunk

        def step(tau, carry):
            h_prev, c_prev = carry
            gates = gx_ref[tau] + jnp.dot(
                h_prev, whh, preferred_element_type=jnp.float32)  # (Bp, 4H)
            # Gate order i | f | o | g: one wide sigmoid, one tanh.
            sig = jax.nn.sigmoid(gates[:, :3 * H])
            g_g = jnp.tanh(gates[:, 3 * H:])
            i_g = sig[:, 0 * H:1 * H]
            f_g = sig[:, 1 * H:2 * H]
            o_g = sig[:, 2 * H:3 * H]
            c_new = f_g * c_prev + i_g * g_g
            h_new = o_g * jnp.tanh(c_new)
            h_out_ref[tau] = h_new
            return (h_new, c_new)

        h_last, c_last = jax.lax.fori_loop(
            0, tt, step, (h_scr[...], c_scr[...]), unroll=unroll)
        h_scr[...] = h_last
        c_scr[...] = c_last

    return kernel


def rnn_forward(x, w_ih, w_hh, b_ih, b_hh, w_out, b_out, *, time_chunk=64):
    """x: (B, T, D) float32.  Returns (B, T, 1) float32 (matches PyTorch module)."""
    B, T, D = x.shape
    H = HIDDEN

    # ---------- hoisted, non-recurrent work (plain XLA) ----------
    w_ih_r = _reorder_gates(w_ih)            # (4H, D), gates i|f|o|g
    w_hh_r = _reorder_gates(w_hh)            # (4H, H)
    b_r = _reorder_gates(b_ih + b_hh)        # (4H,)

    # Input projection for ALL timesteps as one MXU-efficient GEMM.
    gates_x = jnp.einsum("btd,gd->btg", x, w_ih_r) + b_r     # (B, T, 4H)

    # Pad batch to a sublane multiple of 8, time to a multiple of the chunk.
    TT = min(time_chunk, T)
    Bp = -(-B // 8) * 8
    T_pad = -(-T // TT) * TT

    gx = jnp.transpose(gates_x, (1, 0, 2))                         # (T, B, 4H)
    gx = jnp.pad(gx, ((0, T_pad - T), (0, Bp - B), (0, 0)))        # (T_pad, Bp, 4H)
    whh_t = jnp.transpose(w_hh_r, (1, 0))                          # (H, 4H)

    unroll = max(1, min(TT, 8))
    kernel = _make_lstm_chunk_kernel(TT, H, unroll)

    # TODO(synk): for multi-TC parts (v7x) a leading "parallel" batch-group grid
    # axis could shard independent sequences across cores; pointless at B=2.
    h_all = pl.pallas_call(
        kernel,
        out_shape=jax.ShapeDtypeStruct((T_pad, Bp, H), jnp.float32),
        grid_spec=pltpu.PrefetchScalarGridSpec(
            num_scalar_prefetch=0,
            grid=(T_pad // TT,),
            in_specs=[
                pl.BlockSpec((TT, Bp, 4 * H), lambda c: (c, 0, 0)),
                pl.BlockSpec((H, 4 * H), lambda c: (0, 0)),
            ],
            out_specs=pl.BlockSpec((TT, Bp, H), lambda c: (c, 0, 0)),
            scratch_shapes=[
                pltpu.VMEM((Bp, H), jnp.float32),   # h state
                pltpu.VMEM((Bp, H), jnp.float32),   # c state
            ],
        ),
        compiler_params=pltpu.CompilerParams(
            dimension_semantics=("arbitrary",),     # time axis is recurrent
        ),
    )(gx, whh_t)

    # Drop padding, restore batch_first layout, apply hoisted output Linear.
    h = jnp.transpose(h_all[:T, :B], (1, 0, 2))                 # (B, T, H)
    return h @ jnp.transpose(w_out, (1, 0)) + b_out             # (B, T, 1)


def rnn_forward_ref(x, w_ih, w_hh, b_ih, b_hh, w_out, b_out):
    """Pure-JAX reference (lax.scan LSTM) for correctness check."""
    B, T, D = x.shape
    H = HIDDEN
    b = b_ih + b_hh

    def step(carry, x_t):
        h, c = carry
        gates = x_t @ w_ih.T + h @ w_hh.T + b
        i = jax.nn.sigmoid(gates[:, 0 * H:1 * H])
        f = jax.nn.sigmoid(gates[:, 1 * H:2 * H])
        g = jnp.tanh(gates[:, 2 * H:3 * H])
        o = jax.nn.sigmoid(gates[:, 3 * H:4 * H])
        c_new = f * c + i * g
        h_new = o * jnp.tanh(c_new)
        return (h_new, c_new), h_new

    h0 = jnp.zeros((B, H), jnp.float32)
    c0 = jnp.zeros((B, H), jnp.float32)
    _, hs = jax.lax.scan(step, (h0, c0), jnp.transpose(x, (1, 0, 2)))
    hs = jnp.transpose(hs, (1, 0, 2))            # (B, T, H)
    return hs @ w_out.T + b_out                  # (B, T, 1)


if __name__ == "__main__":
    B, T, D = 2, 8, 8
    H = HIDDEN

    key = jax.random.PRNGKey(0)
    ks = jax.random.split(key, 8)
    k = 1.0 / np.sqrt(H)   # PyTorch default init range for LSTM / Linear(fan_in=H)

    x = jax.random.normal(ks[0], (B, T, D), dtype=jnp.float32)
    w_ih = jax.random.uniform(ks[1], (4 * H, D), minval=-k, maxval=k, dtype=jnp.float32)
    w_hh = jax.random.uniform(ks[2], (4 * H, H), minval=-k, maxval=k, dtype=jnp.float32)
    b_ih = jax.random.uniform(ks[3], (4 * H,), minval=-k, maxval=k, dtype=jnp.float32)
    b_hh = jax.random.uniform(ks[4], (4 * H,), minval=-k, maxval=k, dtype=jnp.float32)
    w_out = jax.random.uniform(ks[5], (1, H), minval=-k, maxval=k, dtype=jnp.float32)
    b_out = jax.random.uniform(ks[6], (1,), minval=-k, maxval=k, dtype=jnp.float32)

    out = rnn_forward(x, w_ih, w_hh, b_ih, b_hh, w_out, b_out)
    out = jax.block_until_ready(out)

    ref = rnn_forward_ref(x, w_ih, w_hh, b_ih, b_hh, w_out, b_out)
    assert out.shape == (B, T, 1), out.shape
    np.testing.assert_allclose(np.asarray(out), np.asarray(ref), rtol=1e-4, atol=1e-5)

    print("KERNEL_OK")
</pallas_src>

<mosaic_0001>
module attributes {stable_mosaic.version = 11 : i64} {
  func.func @kernel(%arg0: i32, %arg1: memref<8x8x256xf32, #tpu.memory_space<vmem>>, %arg2: memref<64x256xf32, #tpu.memory_space<vmem>>, %arg3: memref<8x8x64xf32, #tpu.memory_space<vmem>>, %arg4: memref<8x64xf32, #tpu.memory_space<vmem>>, %arg5: memref<8x64xf32, #tpu.memory_space<vmem>>) attributes {dimension_semantics = [#tpu.dimension_semantics<arbitrary>], iteration_bounds = array<i64: 1>, scalar_prefetch = 0 : i64, scratch_operands = 2 : i64, tpu.core_type = #tpu.core_type<tc>, window_params = [{transform_indices = @transform_0, window_bounds = array<i64: 8, 8, 256>}, {pipeline_mode = #tpu.pipeline_mode<synchronous>, transform_indices = @transform_1, window_bounds = array<i64: 64, 256>}, {transform_indices = @transform_2, window_bounds = array<i64: 8, 8, 64>}]} {
    %c0_i32 = arith.constant 0 : i32
    %0 = arith.cmpi eq, %arg0, %c0_i32 : i32
    %1 = arith.extui %0 : i1 to i32
    %c0_i32_0 = arith.constant 0 : i32
    %2 = arith.cmpi ne, %1, %c0_i32_0 : i32
    scf.if %2 {
      %cst_58 = arith.constant 0.000000e+00 : f32
      %208 = vector.broadcast %cst_58 : f32 to vector<8x64xf32>
      %c0_59 = arith.constant 0 : index
      %c0_60 = arith.constant 0 : index
      %209 = vector.load %arg4[%c0_59, %c0_60] : memref<8x64xf32, #tpu.memory_space<vmem>>, vector<8x64xf32>
      tpu.vector_store %arg4[%c0_59, %c0_60], %208 {strides = array<i32>} : memref<8x64xf32, #tpu.memory_space<vmem>>, vector<8x64xf32>,
      %cst_61 = arith.constant 0.000000e+00 : f32
      %210 = vector.broadcast %cst_61 : f32 to vector<8x64xf32>
      %c0_62 = arith.constant 0 : index
      %c0_63 = arith.constant 0 : index
      %211 = vector.load %arg5[%c0_62, %c0_63] : memref<8x64xf32, #tpu.memory_space<vmem>>, vector<8x64xf32>
      tpu.vector_store %arg5[%c0_62, %c0_63], %210 {strides = array<i32>} : memref<8x64xf32, #tpu.memory_space<vmem>>, vector<8x64xf32>,
    } else {
    }
    %c0 = arith.constant 0 : index
    %c0_1 = arith.constant 0 : index
    %3 = vector.load %arg2[%c0, %c0_1] : memref<64x256xf32, #tpu.memory_space<vmem>>, vector<64x256xf32>
    %c0_2 = arith.constant 0 : index
    %c0_3 = arith.constant 0 : index
    %4 = vector.load %arg4[%c0_2, %c0_3] : memref<8x64xf32, #tpu.memory_space<vmem>>, vector<8x64xf32>
    %c0_4 = arith.constant 0 : index
    %c0_5 = arith.constant 0 : index
    %5 = vector.load %arg5[%c0_4, %c0_5] : memref<8x64xf32, #tpu.memory_space<vmem>>, vector<8x64xf32>
    %c0_i32_6 = arith.constant 0 : i32
    %6 = arith.index_cast %c0_i32_6 : i32 to index
    %c0_7 = arith.constant 0 : index
    %c0_8 = arith.constant 0 : index
    %7 = vector.load %arg1[%6, %c0_7, %c0_8] : memref<8x8x256xf32, #tpu.memory_space<vmem>>, vector<1x8x256xf32>
    %8 = vector.shape_cast %7 : vector<1x8x256xf32> to vector<8x256xf32>
    %cst = arith.constant dense<0.000000e+00> : vector<8x256xf32>
    %9 = tpu.matmul %4, %3, %cst {dimension_numbers = #tpu.dot_dimension_numbers<[1], [0], [0], [1], [0, 0, 1, 1], [], []>} : vector<8x64xf32>, vector<64x256xf32>, vector<8x256xf32> -> vector<8x256xf32>
    %10 = arith.addf %8, %9 : vector<8x256xf32>
    %11 = vector.extract_strided_slice %10 {offsets = [0, 0], sizes = [8, 192], strides = [1, 1]} : vector<8x256xf32> to vector<8x192xf32>
    %12 = arith.negf %11 : vector<8x192xf32>
    %13 = math.exp %12 : vector<8x192xf32>
    %cst_9 = arith.constant 1.000000e+00 : f32
    %14 = vector.broadcast %cst_9 : f32 to vector<8x192xf32>
    %15 = arith.addf %14, %13 : vector<8x192xf32>
    %16 = arith.divf %14, %15 : vector<8x192xf32>
    %17 = vector.extract_strided_slice %10 {offsets = [0, 192], sizes = [8, 64], strides = [1, 1]} : vector<8x256xf32> to vector<8x64xf32>
    %18 = math.tanh %17 : vector<8x64xf32>
    %19 = vector.extract_strided_slice %16 {offsets = [0, 0], sizes = [8, 64], strides = [1, 1]} : vector<8x192xf32> to vector<8x64xf32>
    %20 = vector.extract_strided_slice %16 {offsets = [0, 64], sizes = [8, 64], strides = [1, 1]} : vector<8x192xf32> to vector<8x64xf32>
    %21 = vector.extract_strided_slice %16 {offsets = [0, 128], sizes = [8, 64], strides = [1, 1]} : vector<8x192xf32> to vector<8x64xf32>
    %22 = arith.mulf %20, %5 : vector<8x64xf32>
    %23 = arith.mulf %19, %18 : vector<8x64xf32>
    %24 = arith.addf %22, %23 : vector<8x64xf32>
    %25 = math.tanh %24 : vector<8x64xf32>
    %26 = arith.mulf %21, %25 : vector<8x64xf32>
    %27 = arith.index_cast %c0_i32_6 : i32 to index
    %c0_10 = arith.constant 0 : index
    %c0_11 = arith.constant 0 : index
    %28 = vector.load %arg3[%27, %c0_10, %c0_11] : memref<8x8x64xf32, #tpu.memory_space<vmem>>, vector<1x8x64xf32>
    %29 = vector.shape_cast %28 : vector<1x8x64xf32> to vector<8x64xf32>
    %30 = vector.shape_cast %26 : vector<8x64xf32> to vector<1x8x64xf32>
    tpu.vector_store %arg3[%27, %c0_10, %c0_11], %30 {strides = array<i32>} : memref<8x8x64xf32, #tpu.memory_space<vmem>>, vector<1x8x64xf32>,
    %c1_i32 = arith.constant 1 : i32
    %31 = arith.index_cast %c1_i32 : i32 to index
    %c0_12 = arith.constant 0 : index
    %c0_13 = arith.constant 0 : index
    %32 = vector.load %arg1[%31, %c0_12, %c0_13] : memref<8x8x256xf32, #tpu.memory_space<vmem>>, vector<1x8x256xf32>
    %33 = vector.shape_cast %32 : vector<1x8x256xf32> to vector<8x256xf32>
    %cst_14 = arith.constant dense<0.000000e+00> : vector<8x256xf32>
    %34 = tpu.matmul %26, %3, %cst_14 {dimension_numbers = #tpu.dot_dimension_numbers<[1], [0], [0], [1], [0, 0, 1, 1], [], []>} : vector<8x64xf32>, vector<64x256xf32>, vector<8x256xf32> -> vector<8x256xf32>
    %35 = arith.addf %33, %34 : vector<8x256xf32>
    %36 = vector.extract_strided_slice %35 {offsets = [0, 0], sizes = [8, 192], strides = [1, 1]} : vector<8x256xf32> to vector<8x192xf32>
    %37 = arith.negf %36 : vector<8x192xf32>
    %38 = math.exp %37 : vector<8x192xf32>
    %cst_15 = arith.constant 1.000000e+00 : f32
    %39 = vector.broadcast %cst_15 : f32 to vector<8x192xf32>
    %40 = arith.addf %39, %38 : vector<8x192xf32>
    %41 = arith.divf %39, %40 : vector<8x192xf32>
    %42 = vector.extract_strided_slice %35 {offsets = [0, 192], sizes = [8, 64], strides = [1, 1]} : vector<8x256xf32> to vector<8x64xf32>
    %43 = math.tanh %42 : vector<8x64xf32>
    %44 = vector.extract_strided_slice %41 {offsets = [0, 0], sizes = [8, 64], strides = [1, 1]} : vector<8x192xf32> to vector<8x64xf32>
    %45 = vector.extract_strided_slice %41 {offsets = [0, 64], sizes = [8, 64], strides = [1, 1]} : vector<8x192xf32> to vector<8x64xf32>
    %46 = vector.extract_strided_slice %41 {offsets = [0, 128], sizes = [8, 64], strides = [1, 1]} : vector<8x192xf32> to vector<8x64xf32>
    %47 = arith.mulf %45, %24 : vector<8x64xf32>
    %48 = arith.mulf %44, %43 : vector<8x64xf32>
    %49 = arith.addf %47, %48 : vector<8x64xf32>
    %50 = math.tanh %49 : vector<8x64xf32>
    %51 = arith.mulf %46, %50 : vector<8x64xf32>
    %52 = arith.index_cast %c1_i32 : i32 to index
    %c0_16 = arith.constant 0 : index
    %c0_17 = arith.constant 0 : index
    %53 = vector.load %arg3[%52, %c0_16, %c0_17] : memref<8x8x64xf32, #tpu.memory_space<vmem>>, vector<1x8x64xf32>
    %54 = vector.shape_cast %53 : vector<1x8x64xf32> to vector<8x64xf32>
    %55 = vector.shape_cast %51 : vector<8x64xf32> to vector<1x8x64xf32>
    tpu.vector_store %arg3[%52, %c0_16, %c0_17], %55 {strides = array<i32>} : memref<8x8x64xf32, #tpu.memory_space<vmem>>, vector<1x8x64xf32>,
    %c2_i32 = arith.constant 2 : i32
    %56 = arith.index_cast %c2_i32 : i32 to index
    %c0_18 = arith.constant 0 : index
    %c0_19 = arith.constant 0 : index
    %57 = vector.load %arg1[%56, %c0_18, %c0_19] : memref<8x8x256xf32, #tpu.memory_space<vmem>>, vector<1x8x256xf32>
    %58 = vector.shape_cast %57 : vector<1x8x256xf32> to vector<8x256xf32>
    %cst_20 = arith.constant dense<0.000000e+00> : vector<8x256xf32>
    %59 = tpu.matmul %51, %3, %cst_20 {dimension_numbers = #tpu.dot_dimension_numbers<[1], [0], [0], [1], [0, 0, 1, 1], [], []>} : vector<8x64xf32>, vector<64x256xf32>, vector<8x256xf32> -> vector<8x256xf32>
    %60 = arith.addf %58, %59 : vector<8x256xf32>
    %61 = vector.extract_strided_slice %60 {offsets = [0, 0], sizes = [8, 192], strides = [1, 1]} : vector<8x256xf32> to vector<8x192xf32>
    %62 = arith.negf %61 : vector<8x192xf32>
    %63 = math.exp %62 : vector<8x192xf32>
    %cst_21 = arith.constant 1.000000e+00 : f32
    %64 = vector.broadcast %cst_21 : f32 to vector<8x192xf32>
    %65 = arith.addf %64, %63 : vector<8x192xf32>
    %66 = arith.divf %64, %65 : vector<8x192xf32>
    %67 = vector.extract_strided_slice %60 {offsets = [0, 192], sizes = [8, 64], strides = [1, 1]} : vector<8x256xf32> to vector<8x64xf32>
    %68 = math.tanh %67 : vector<8x64xf32>
    %69 = vector.extract_strided_slice %66 {offsets = [0, 0], sizes = [8, 64], strides = [1, 1]} : vector<8x192xf32> to vector<8x64xf32>
    %70 = vector.extract_strided_slice %66 {offsets = [0, 64], sizes = [8, 64], strides = [1, 1]} : vector<8x192xf32> to vector<8x64xf32>
    %71 = vector.extract_strided_slice %66 {offsets = [0, 128], sizes = [8, 64], strides = [1, 1]} : vector<8x192xf32> to vector<8x64xf32>
    %72 = arith.mulf %70, %49 : vector<8x64xf32>
    %73 = arith.mulf %69, %68 : vector<8x64xf32>
    %74 = arith.addf %72, %73 : vector<8x64xf32>
    %75 = math.tanh %74 : vector<8x64xf32>
    %76 = arith.mulf %71, %75 : vector<8x64xf32>
    %77 = arith.index_cast %c2_i32 : i32 to index
    %c0_22 = arith.constant 0 : index
    %c0_23 = arith.constant 0 : index
    %78 = vector.load %arg3[%77, %c0_22, %c0_23] : memref<8x8x64xf32, #tpu.memory_space<vmem>>, vector<1x8x64xf32>
    %79 = vector.shape_cast %78 : vector<1x8x64xf32> to vector<8x64xf32>
    %80 = vector.shape_cast %76 : vector<8x64xf32> to vector<1x8x64xf32>
    tpu.vector_store %arg3[%77, %c0_22, %c0_23], %80 {strides = array<i32>} : memref<8x8x64xf32, #tpu.memory_space<vmem>>, vector<1x8x64xf32>,
    %c3_i32 = arith.constant 3 : i32
    %81 = arith.index_cast %c3_i32 : i32 to index
    %c0_24 = arith.constant 0 : index
    %c0_25 = arith.constant 0 : index
    %82 = vector.load %arg1[%81, %c0_24, %c0_25] : memref<8x8x256xf32, #tpu.memory_space<vmem>>, vector<1x8x256xf32>
    %83 = vector.shape_cast %82 : vector<1x8x256xf32> to vector<8x256xf32>
    %cst_26 = arith.constant dense<0.000000e+00> : vector<8x256xf32>
    %84 = tpu.matmul %76, %3, %cst_26 {dimension_numbers = #tpu.dot_dimension_numbers<[1], [0], [0], [1], [0, 0, 1, 1], [], []>} : vector<8x64xf32>, vector<64x256xf32>, vector<8x256xf32> -> vector<8x256xf32>
    %85 = arith.addf %83, %84 : vector<8x256xf32>
    %86 = vector.extract_strided_slice %85 {offsets = [0, 0], sizes = [8, 192], strides = [1, 1]} : vector<8x256xf32> to vector<8x192xf32>
    %87 = arith.negf %86 : vector<8x192xf32>
    %88 = math.exp %87 : vector<8x192xf32>
    %cst_27 = arith.constant 1.000000e+00 : f32
    %89 = vector.broadcast %cst_27 : f32 to vector<8x192xf32>
    %90 = arith.addf %89, %88 : vector<8x192xf32>
    %91 = arith.divf %89, %90 : vector<8x192xf32>
    %92 = vector.extract_strided_slice %85 {offsets = [0, 192], sizes = [8, 64], strides = [1, 1]} : vector<8x256xf32> to vector<8x64xf32>
    %93 = math.tanh %92 : vector<8x64xf32>
    %94 = vector.extract_strided_slice %91 {offsets = [0, 0], sizes = [8, 64], strides = [1, 1]} : vector<8x192xf32> to vector<8x64xf32>
    %95 = vector.extract_strided_slice %91 {offsets = [0, 64], sizes = [8, 64], strides = [1, 1]} : vector<8x192xf32> to vector<8x64xf32>
    %96 = vector.extract_strided_slice %91 {offsets = [0, 128], sizes = [8, 64], strides = [1, 1]} : vector<8x192xf32> to vector<8x64xf32>
    %97 = arith.mulf %95, %74 : vector<8x64xf32>
    %98 = arith.mulf %94, %93 : vector<8x64xf32>
    %99 = arith.addf %97, %98 : vector<8x64xf32>
    %100 = math.tanh %99 : vector<8x64xf32>
    %101 = arith.mulf %96, %100 : vector<8x64xf32>
    %102 = arith.index_cast %c3_i32 : i32 to index
    %c0_28 = arith.constant 0 : index
    %c0_29 = arith.constant 0 : index
    %103 = vector.load %arg3[%102, %c0_28, %c0_29] : memref<8x8x64xf32, #tpu.memory_space<vmem>>, vector<1x8x64xf32>
    %104 = vector.shape_cast %103 : vector<1x8x64xf32> to vector<8x64xf32>
    %105 = vector.shape_cast %101 : vector<8x64xf32> to vector<1x8x64xf32>
    tpu.vector_store %arg3[%102, %c0_28, %c0_29], %105 {strides = array<i32>} : memref<8x8x64xf32, #tpu.memory_space<vmem>>, vector<1x8x64xf32>,
    %c4_i32 = arith.constant 4 : i32
    %106 = arith.index_cast %c4_i32 : i32 to index
    %c0_30 = arith.constant 0 : index
    %c0_31 = arith.constant 0 : index
    %107 = vector.load %arg1[%106, %c0_30, %c0_31] : memref<8x8x256xf32, #tpu.memory_space<vmem>>, vector<1x8x256xf32>
    %108 = vector.shape_cast %107 : vector<1x8x256xf32> to vector<8x256xf32>
    %cst_32 = arith.constant dense<0.000000e+00> : vector<8x256xf32>
    %109 = tpu.matmul %101, %3, %cst_32 {dimension_numbers = #tpu.dot_dimension_numbers<[1], [0], [0], [1], [0, 0, 1, 1], [], []>} : vector<8x64xf32>, vector<64x256xf32>, vector<8x256xf32> -> vector<8x256xf32>
    %110 = arith.addf %108, %109 : vector<8x256xf32>
    %111 = vector.extract_strided_slice %110 {offsets = [0, 0], sizes = [8, 192], strides = [1, 1]} : vector<8x256xf32> to vector<8x192xf32>
    %112 = arith.negf %111 : vector<8x192xf32>
    %113 = math.exp %112 : vector<8x192xf32>
    %cst_33 = arith.constant 1.000000e+00 : f32
    %114 = vector.broadcast %cst_33 : f32 to vector<8x192xf32>
    %115 = arith.addf %114, %113 : vector<8x192xf32>
    %116 = arith.divf %114, %115 : vector<8x192xf32>
    %117 = vector.extract_strided_slice %110 {offsets = [0, 192], sizes = [8, 64], strides = [1, 1]} : vector<8x256xf32> to vector<8x64xf32>
    %118 = math.tanh %117 : vector<8x64xf32>
    %119 = vector.extract_strided_slice %116 {offsets = [0, 0], sizes = [8, 64], strides = [1, 1]} : vector<8x192xf32> to vector<8x64xf32>
    %120 = vector.extract_strided_slice %116 {offsets = [0, 64], sizes = [8, 64], strides = [1, 1]} : vector<8x192xf32> to vector<8x64xf32>
    %121 = vector.extract_strided_slice %116 {offsets = [0, 128], sizes = [8, 64], strides = [1, 1]} : vector<8x192xf32> to vector<8x64xf32>
    %122 = arith.mulf %120, %99 : vector<8x64xf32>
    %123 = arith.mulf %119, %118 : vector<8x64xf32>
    %124 = arith.addf %122, %123 : vector<8x64xf32>
    %125 = math.tanh %124 : vector<8x64xf32>
    %126 = arith.mulf %121, %125 : vector<8x64xf32>
    %127 = arith.index_cast %c4_i32 : i32 to index
    %c0_34 = arith.constant 0 : index
    %c0_35 = arith.constant 0 : index
    %128 = vector.load %arg3[%127, %c0_34, %c0_35] : memref<8x8x64xf32, #tpu.memory_space<vmem>>, vector<1x8x64xf32>
    %129 = vector.shape_cast %128 : vector<1x8x64xf32> to vector<8x64xf32>
    %130 = vector.shape_cast %126 : vector<8x64xf32> to vector<1x8x64xf32>
    tpu.vector_store %arg3[%127, %c0_34, %c0_35], %130 {strides = array<i32>} : memref<8x8x64xf32, #tpu.memory_space<vmem>>, vector<1x8x64xf32>,
    %c5_i32 = arith.constant 5 : i32
    %131 = arith.index_cast %c5_i32 : i32 to index
    %c0_36 = arith.constant 0 : index
    %c0_37 = arith.constant 0 : index
    %132 = vector.load %arg1[%131, %c0_36, %c0_37] : memref<8x8x256xf32, #tpu.memory_space<vmem>>, vector<1x8x256xf32>
    %133 = vector.shape_cast %132 : vector<1x8x256xf32> to vector<8x256xf32>
    %cst_38 = arith.constant dense<0.000000e+00> : vector<8x256xf32>
    %134 = tpu.matmul %126, %3, %cst_38 {dimension_numbers = #tpu.dot_dimension_numbers<[1], [0], [0], [1], [0, 0, 1, 1], [], []>} : vector<8x64xf32>, vector<64x256xf32>, vector<8x256xf32> -> vector<8x256xf32>
    %135 = arith.addf %133, %134 : vector<8x256xf32>
    %136 = vector.extract_strided_slice %135 {offsets = [0, 0], sizes = [8, 192], strides = [1, 1]} : vector<8x256xf32> to vector<8x192xf32>
    %137 = arith.negf %136 : vector<8x192xf32>
    %138 = math.exp %137 : vector<8x192xf32>
    %cst_39 = arith.constant 1.000000e+00 : f32
    %139 = vector.broadcast %cst_39 : f32 to vector<8x192xf32>
    %140 = arith.addf %139, %138 : vector<8x192xf32>
    %141 = arith.divf %139, %140 : vector<8x192xf32>
    %142 = vector.extract_strided_slice %135 {offsets = [0, 192], sizes = [8, 64], strides = [1, 1]} : vector<8x256xf32> to vector<8x64xf32>
    %143 = math.tanh %142 : vector<8x64xf32>
    %144 = vector.extract_strided_slice %141 {offsets = [0, 0], sizes = [8, 64], strides = [1, 1]} : vector<8x192xf32> to vector<8x64xf32>
    %145 = vector.extract_strided_slice %141 {offsets = [0, 64], sizes = [8, 64], strides = [1, 1]} : vector<8x192xf32> to vector<8x64xf32>
    %146 = vector.extract_strided_slice %141 {offsets = [0, 128], sizes = [8, 64], strides = [1, 1]} : vector<8x192xf32> to vector<8x64xf32>
    %147 = arith.mulf %145, %124 : vector<8x64xf32>
    %148 = arith.mulf %144, %143 : vector<8x64xf32>
    %149 = arith.addf %147, %148 : vector<8x64xf32>
    %150 = math.tanh %149 : vector<8x64xf32>
    %151 = arith.mulf %146, %150 : vector<8x64xf32>
    %152 = arith.index_cast %c5_i32 : i32 to index
    %c0_40 = arith.constant 0 : index
    %c0_41 = arith.constant 0 : index
    %153 = vector.load %arg3[%152, %c0_40, %c0_41] : memref<8x8x64xf32, #tpu.memory_space<vmem>>, vector<1x8x64xf32>
    %154 = vector.shape_cast %153 : vector<1x8x64xf32> to vector<8x64xf32>
    %155 = vector.shape_cast %151 : vector<8x64xf32> to vector<1x8x64xf32>
    tpu.vector_store %arg3[%152, %c0_40, %c0_41], %155 {strides = array<i32>} : memref<8x8x64xf32, #tpu.memory_space<vmem>>, vector<1x8x64xf32>,
    %c6_i32 = arith.constant 6 : i32
    %156 = arith.index_cast %c6_i32 : i32 to index
    %c0_42 = arith.constant 0 : index
    %c0_43 = arith.constant 0 : index
    %157 = vector.load %arg1[%156, %c0_42, %c0_43] : memref<8x8x256xf32, #tpu.memory_space<vmem>>, vector<1x8x256xf32>
    %158 = vector.shape_cast %157 : vector<1x8x256xf32> to vector<8x256xf32>
    %cst_44 = arith.constant dense<0.000000e+00> : vector<8x256xf32>
    %159 = tpu.matmul %151, %3, %cst_44 {dimension_numbers = #tpu.dot_dimension_numbers<[1], [0], [0], [1], [0, 0, 1, 1], [], []>} : vector<8x64xf32>, vector<64x256xf32>, vector<8x256xf32> -> vector<8x256xf32>
    %160 = arith.addf %158, %159 : vector<8x256xf32>
    %161 = vector.extract_strided_slice %160 {offsets = [0, 0], sizes = [8, 192], strides = [1, 1]} : vector<8x256xf32> to vector<8x192xf32>
    %162 = arith.negf %161 : vector<8x192xf32>
    %163 = math.exp %162 : vector<8x192xf32>
    %cst_45 = arith.constant 1.000000e+00 : f32
    %164 = vector.broadcast %cst_45 : f32 to vector<8x192xf32>
    %165 = arith.addf %164, %163 : vector<8x192xf32>
    %166 = arith.divf %164, %165 : vector<8x192xf32>
    %167 = vector.extract_strided_slice %160 {offsets = [0, 192], sizes = [8, 64], strides = [1, 1]} : vector<8x256xf32> to vector<8x64xf32>
    %168 = math.tanh %167 : vector<8x64xf32>
    %169 = vector.extract_strided_slice %166 {offsets = [0, 0], sizes = [8, 64], strides = [1, 1]} : vector<8x192xf32> to vector<8x64xf32>
    %170 = vector.extract_strided_slice %166 {offsets = [0, 64], sizes = [8, 64], strides = [1, 1]} : vector<8x192xf32> to vector<8x64xf32>
    %171 = vector.extract_strided_slice %166 {offsets = [0, 128], sizes = [8, 64], strides = [1, 1]} : vector<8x192xf32> to vector<8x64xf32>
    %172 = arith.mulf %170, %149 : vector<8x64xf32>
    %173 = arith.mulf %169, %168 : vector<8x64xf32>
    %174 = arith.addf %172, %173 : vector<8x64xf32>
    %175 = math.tanh %174 : vector<8x64xf32>
    %176 = arith.mulf %171, %175 : vector<8x64xf32>
    %177 = arith.index_cast %c6_i32 : i32 to index
    %c0_46 = arith.constant 0 : index
    %c0_47 = arith.constant 0 : index
    %178 = vector.load %arg3[%177, %c0_46, %c0_47] : memref<8x8x64xf32, #tpu.memory_space<vmem>>, vector<1x8x64xf32>
    %179 = vector.shape_cast %178 : vector<1x8x64xf32> to vector<8x64xf32>
    %180 = vector.shape_cast %176 : vector<8x64xf32> to vector<1x8x64xf32>
    tpu.vector_store %arg3[%177, %c0_46, %c0_47], %180 {strides = array<i32>} : memref<8x8x64xf32, #tpu.memory_space<vmem>>, vector<1x8x64xf32>,
    %c7_i32 = arith.constant 7 : i32
    %181 = arith.index_cast %c7_i32 : i32 to index
    %c0_48 = arith.constant 0 : index
    %c0_49 = arith.constant 0 : index
    %182 = vector.load %arg1[%181, %c0_48, %c0_49] : memref<8x8x256xf32, #tpu.memory_space<vmem>>, vector<1x8x256xf32>
    %183 = vector.shape_cast %182 : vector<1x8x256xf32> to vector<8x256xf32>
    %cst_50 = arith.constant dense<0.000000e+00> : vector<8x256xf32>
    %184 = tpu.matmul %176, %3, %cst_50 {dimension_numbers = #tpu.dot_dimension_numbers<[1], [0], [0], [1], [0, 0, 1, 1], [], []>} : vector<8x64xf32>, vector<64x256xf32>, vector<8x256xf32> -> vector<8x256xf32>
    %185 = arith.addf %183, %184 : vector<8x256xf32>
    %186 = vector.extract_strided_slice %185 {offsets = [0, 0], sizes = [8, 192], strides = [1, 1]} : vector<8x256xf32> to vector<8x192xf32>
    %187 = arith.negf %186 : vector<8x192xf32>
    %188 = math.exp %187 : vector<8x192xf32>
    %cst_51 = arith.constant 1.000000e+00 : f32
    %189 = vector.broadcast %cst_51 : f32 to vector<8x192xf32>
    %190 = arith.addf %189, %188 : vector<8x192xf32>
    %191 = arith.divf %189, %190 : vector<8x192xf32>
    %192 = vector.extract_strided_slice %185 {offsets = [0, 192], sizes = [8, 64], strides = [1, 1]} : vector<8x256xf32> to vector<8x64xf32>
    %193 = math.tanh %192 : vector<8x64xf32>
    %194 = vector.extract_strided_slice %191 {offsets = [0, 0], sizes = [8, 64], strides = [1, 1]} : vector<8x192xf32> to vector<8x64xf32>
    %195 = vector.extract_strided_slice %191 {offsets = [0, 64], sizes = [8, 64], strides = [1, 1]} : vector<8x192xf32> to vector<8x64xf32>
    %196 = vector.extract_strided_slice %191 {offsets = [0, 128], sizes = [8, 64], strides = [1, 1]} : vector<8x192xf32> to vector<8x64xf32>
    %197 = arith.mulf %195, %174 : vector<8x64xf32>
    %198 = arith.mulf %194, %193 : vector<8x64xf32>
    %199 = arith.addf %197, %198 : vector<8x64xf32>
    %200 = math.tanh %199 : vector<8x64xf32>
    %201 = arith.mulf %196, %200 : vector<8x64xf32>
    %202 = arith.index_cast %c7_i32 : i32 to index
    %c0_52 = arith.constant 0 : index
    %c0_53 = arith.constant 0 : index
    %203 = vector.load %arg3[%202, %c0_52, %c0_53] : memref<8x8x64xf32, #tpu.memory_space<vmem>>, vector<1x8x64xf32>
    %204 = vector.shape_cast %203 : vector<1x8x64xf32> to vector<8x64xf32>
    %205 = vector.shape_cast %201 : vector<8x64xf32> to vector<1x8x64xf32>
    tpu.vector_store %arg3[%202, %c0_52, %c0_53], %205 {strides = array<i32>} : memref<8x8x64xf32, #tpu.memory_space<vmem>>, vector<1x8x64xf32>,
    %c8_i32 = arith.constant 8 : i32
    %c0_54 = arith.constant 0 : index
    %c0_55 = arith.constant 0 : index
    %206 = vector.load %arg4[%c0_54, %c0_55] : memref<8x64xf32, #tpu.memory_space<vmem>>, vector<8x64xf32>
    tpu.vector_store %arg4[%c0_54, %c0_55], %201 {strides = array<i32>} : memref<8x64xf32, #tpu.memory_space<vmem>>, vector<8x64xf32>,
    %c0_56 = arith.constant 0 : index
    %c0_57 = arith.constant 0 : index
    %207 = vector.load %arg5[%c0_56, %c0_57] : memref<8x64xf32, #tpu.memory_space<vmem>>, vector<8x64xf32>
    tpu.vector_store %arg5[%c0_56, %c0_57], %199 {strides = array<i32>} : memref<8x64xf32, #tpu.memory_space<vmem>>, vector<8x64xf32>,
    return
  }
  func.func @transform_0(%arg0: i32) -> (i32, i32, i32) {
    %c0_i32 = arith.constant 0 : i32
    %c0_i32_0 = arith.constant 0 : i32
    %c0_i32_1 = arith.constant 0 : i32
    return %arg0, %c0_i32, %c0_i32_0 : i32, i32, i32
  }
  func.func @transform_1(%arg0: i32) -> (i32, i32) {
    %c0_i32 = arith.constant 0 : i32
    %c0_i32_0 = arith.constant 0 : i32
    %c0_i32_1 = arith.constant 0 : i32
    return %c0_i32, %c0_i32_0 : i32, i32
  }
  func.func @transform_2(%arg0: i32) -> (i32, i32, i32) {
    %c0_i32 = arith.constant 0 : i32
    %c0_i32_0 = arith.constant 0 : i32
    %c0_i32_1 = arith.constant 0 : i32
    return %arg0, %c0_i32, %c0_i32_0 : i32, i32, i32
  }
}

</mosaic_0001>

<llo_original>
// kernel: tpu_custom_call.1
$region0: #{tpu_custom_call.1}
  #allocation0 [shape = 'u32[]', space=smem, size = 0x4, offset = 0x4, fixed_abs, tag = 'smem constant byte address 0x4 - core index']
  #allocation1 [shape = 'u32[144,128]{1,0:T(1,128)}', space=vmem, size = 0x12000, scoped, tag = 'internal scratch']
  #allocation2 [shape = 'f32[8,64]{1,0:T(8,128)}', space=vmem, size = 0x1000, scoped, tag = 'scratch operand']
  #allocation3 [shape = 'f32[8,64]{1,0:T(8,128)}', space=vmem, size = 0x1000, scoped, tag = 'scratch operand']
  %s0 = inlined_call_operand.hbm [shape: f32[8,8,256], index: 0, kind: input, shape index: {}]
  %s1 = inlined_call_operand.hbm [shape: f32[64,256], index: 1, kind: input, shape index: {}]
  %s2 = inlined_call_operand.hbm [shape: f32[8,8,64], index: 2, kind: output, shape index: {}]
  %s3 = sld [smem:[#allocation0]]
  $region30: #{tpu_custom_call.1} parent=0
    _
  %s5 = ssub.s32 1, %s3
  %s6 = scalar_select 0, %s5, %s3
  $region1: #{tpu_custom_call.1} parent=0
    #allocation4 [shape = 'u8[65536]{0}', space=vmem, size = 0x10000, scoped, tag = 'input window, operand 0, single buffered']
    #allocation5 [shape = 's32[1]{0}', space=sflag, size = 0x4, scoped, tag = 'scoped memory for tpu_custom_call.1']
    #allocation6 [shape = 's32[1]{0}', space=sflag, size = 0x4, scoped, tag = 'scoped memory for tpu_custom_call.1']
    #allocation7 [shape = 'u8[65536]{0}', space=vmem, size = 0x10000, scoped, tag = 'input window, operand 1, single buffered']
    #allocation8 [shape = 's32[1]{0}', space=sflag, size = 0x4, scoped, tag = 'scoped memory for tpu_custom_call.1']
    #allocation9 [shape = 'u8[32768]{0}', space=vmem, size = 0x8000, scoped, tag = 'output window, operand 0, single buffered']
    %7 = vsyncpa [#allocation5], 0
    %8 = vsyncpa [#allocation8], 0
    %9 = vsyncpa [#allocation6], 0
    // Predicated region
    $region2: #{tpu_custom_call.1} parent=1 // pred_check
      _
    $region3: #{tpu_custom_call.1} parent=1 // pred_check_branch
      %11 = sbr.rel (0) target = $region5
    $region4: #{tpu_custom_call.1} parent=1 // pred_region
      %s13 = ssub.s32 2048, 2048
      %14 = vsyncadd [#allocation5], %s13
      %s15 = sshll.u32 [#allocation4], 4
      %s16 = int_to_ptr.vmem [resolvable:$true] %s15
      %21 = dma.hbm_to_vmem [thread:$0]  %s0, 2048, %s16, [#allocation5], 256, 256, 16
    $region5: #{tpu_custom_call.1} parent=1 // pred_fallthru
      _
    // Predicated region
    $region6: #{tpu_custom_call.1} parent=1 // pred_check
      _
    $region7: #{tpu_custom_call.1} parent=1 // pred_check_branch
      %23 = sbr.rel (0) target = $region9
    $region8: #{tpu_custom_call.1} parent=1 // pred_region
      %s25 = ssub.s32 2048, 2048
      %26 = vsyncadd [#allocation8], %s25
      %s27 = sshll.u32 [#allocation7], 4
      %s28 = int_to_ptr.vmem [resolvable:$true] %s27
      %33 = dma.hbm_to_vmem [thread:$0]  %s1, 2048, %s28, [#allocation8], 256, 256, 16
    $region9: #{tpu_custom_call.1} parent=1 // pred_fallthru
      _
    // Predicated region
    $region10: #{tpu_custom_call.1} parent=1 // pred_check
      _
    $region11: #{tpu_custom_call.1} parent=1 // pred_check_branch
      %35 = sbr.rel (0) target = $region13
    $region12: #{tpu_custom_call.1} parent=1 // pred_region
      %36 = dma.done [#allocation5], 2048
    $region13: #{tpu_custom_call.1} parent=1 // pred_fallthru
      _
    // Predicated region
    $region14: #{tpu_custom_call.1} parent=1 // pred_check
      _
    $region15: #{tpu_custom_call.1} parent=1 // pred_check_branch
      %38 = sbr.rel (0) target = $region17
    $region16: #{tpu_custom_call.1} parent=1 // pred_region
      %39 = dma.done [#allocation8], 2048
    $region17: #{tpu_custom_call.1} parent=1 // pred_fallthru
      _
    %p40 = scmp.eq.s32.totalorder 0, 0
    // Predicated region
    $region18: #{tpu_custom_call.1} parent=1 // pred_check
      %p41 = pneg %p40
    $region19: #{tpu_custom_call.1} parent=1 // pred_check_branch
      %43 = sbr.rel (%p41) target = $region21
    $region20: #{tpu_custom_call.1} parent=1 // pred_region
      %vm44 = vcmask 523264
      %45 = vst.msk [vmem:[#allocation2] sm:$0xff] %vm44, 0.0
      %46 = vst.msk [vmem:[#allocation3] sm:$0xff] %vm44, 0.0
    $region21: #{tpu_custom_call.1} parent=1 // pred_fallthru
      _
    %v47 = vld [vmem:[#allocation7] sm:$0xff]
    %v48 = vld [vmem:[#allocation7 + $0x8] sm:$0xff]
    %v49 = vld [vmem:[#allocation7 + $0x10] sm:$0xff]
    %v50 = vld [vmem:[#allocation7 + $0x18] sm:$0xff]
    %v51 = vld [vmem:[#allocation7 + $0x20] sm:$0xff]
    %v52 = vld [vmem:[#allocation7 + $0x28] sm:$0xff]
    %v53 = vld [vmem:[#allocation7 + $0x30] sm:$0xff]
    %v54 = vld [vmem:[#allocation7 + $0x38] sm:$0xff]
    %v55 = vld [vmem:[#allocation7 + $0x40] sm:$0xff]
    %v56 = vld [vmem:[#allocation7 + $0x48] sm:$0xff]
    %v57 = vld [vmem:[#allocation7 + $0x50] sm:$0xff]
    %v58 = vld [vmem:[#allocation7 + $0x58] sm:$0xff]
    %v59 = vld [vmem:[#allocation7 + $0x60] sm:$0xff]
    %v60 = vld [vmem:[#allocation7 + $0x68] sm:$0xff]
    %v61 = vld [vmem:[#allocation7 + $0x70] sm:$0xff]
    %v62 = vld [vmem:[#allocation7 + $0x78] sm:$0xff]
    %v63 = vld [vmem:[#allocation2] sm:$0xff]
    %v64 = vld [vmem:[#allocation3] sm:$0xff]
    %v65 = vld [vmem:[#allocation4] sm:$0xff]
    %v66 = vld [vmem:[#allocation4 + $0x8] sm:$0xff]
    %vm67 = vcmask 523264
    %v69 = vsel %vm67, %v63, 0
    %71 = vmatprep.subr.mxu0 0.0
    %72 = vmatpush1.msra.mxu0 0.0
    %73 = vmatprep.subr.mxu0 0.0
    %74 = vmatpush1.msra.mxu0 0.0
    %75 = vmatprep.subr.mxu0 0.0
    %76 = vmatpush1.msra.mxu0 0.0
    %77 = vmatprep.subr.mxu0 0.0
    %78 = vmatpush1.msra.mxu0 0.0
    %79 = vmatprep.subr.mxu0 0.0
    %80 = vmatpush1.msra.mxu0 0.0
    %81 = vmatprep.subr.mxu0 0.0
    %82 = vmatpush1.msra.mxu0 0.0
    %83 = vmatprep.subr.mxu0 0.0
    %84 = vmatpush1.msra.mxu0 0.0
    %85 = vmatprep.subr.mxu0 0.0
    %86 = vmatpush1.msra.mxu0 0.0
    %87 = vmatprep.subr.mxu0 %v62
    %88 = vmatpush1.msra.mxu0 %v61
    %89 = vmatprep.subr.mxu0 %v60
    %90 = vmatpush1.msra.mxu0 %v59
    %91 = vmatprep.subr.mxu0 %v58
    %92 = vmatpush1.msra.mxu0 %v57
    %93 = vmatprep.subr.mxu0 %v56
    %94 = vmatpush1.msra.mxu0 %v55
    %95 = vmatprep.subr.mxu0 %v54
    %96 = vmatpush1.msra.mxu0 %v53
    %97 = vmatprep.subr.mxu0 %v52
    %98 = vmatpush1.msra.mxu0 %v51
    %99 = vmatprep.subr.mxu0 %v50
    %100 = vmatpush1.msra.mxu0 %v49
    %101 = vmatprep.subr.mxu0 %v48
    %102 = vmatpush1.msra.mxu0 %v47
    %103 = vmatprep.subr.mxu0 0.0
    %104 = vmatpush2.msra.mxu0 0.0
    %105 = vmatprep.subr.mxu0 0.0
    %106 = vmatpush2.msra.mxu0 0.0
    %107 = vmatprep.subr.mxu0 0.0
    %108 = vmatpush2.msra.mxu0 0.0
    %109 = vmatprep.subr.mxu0 0.0
    %110 = vmatpush2.msra.mxu0 0.0
    %111 = vmatprep.subr.mxu0 0.0
    %112 = vmatpush2.msra.mxu0 0.0
    %113 = vmatprep.subr.mxu0 0.0
    %114 = vmatpush2.msra.mxu0 0.0
    %115 = vmatprep.subr.mxu0 0.0
    %116 = vmatpush2.msra.mxu0 0.0
    %117 = vmatprep.subr.mxu0 0.0
    %118 = vmatpush2.msra.mxu0 0.0
    %119 = vmatprep.subr.mxu0 0.0
    %120 = vmatpush2.msra.mxu0 0.0
    %121 = vmatprep.subr.mxu0 0.0
    %122 = vmatpush2.msra.mxu0 0.0
    %123 = vmatprep.subr.mxu0 0.0
    %124 = vmatpush2.msra.mxu0 0.0
    %125 = vmatprep.subr.mxu0 0.0
    %126 = vmatpush2.msra.mxu0 0.0
    %127 = vmatprep.subr.mxu0 0.0
    %128 = vmatpush2.msra.mxu0 0.0
    %129 = vmatprep.subr.mxu0 0.0
    %130 = vmatpush2.msra.mxu0 0.0
    %131 = vmatprep.subr.mxu0 0.0
    %132 = vmatpush2.msra.mxu0 0.0
    %133 = vmatprep.subr.mxu0 0.0
    %134 = vmatpush2.msra.mxu0 0.0
    %135 = vmatprep.mubr.f32.mxu0 0.0
    %136 = vmatmul.mubr.f32.gmra.mxu0 %v69
    %v137 = vpop.f32.mrf.mxu0
    %v138 = vadd.f32 0.0, %v137
    %v139 = vpop.f32.mrf.mxu0
    %v140 = vadd.f32 0.0, %v139
    %141 = vdwg.mxu0
    %v142 = vadd.f32 %v65, %v138
    %v143 = vadd.f32 %v66, %v140
    %v144 = vxor.u32 %v142, 2147483648
    %v145 = vxor.u32 %v143, 2147483648
    %v146 = vmul.f32 %v144, 1.442695
    %v147 = vpow.pop %v146
    %v148 = vmul.f32 %v145, 1.442695
    %v149 = vpow.pop %v148
    %v150 = vadd.f32 %v147, 1.0
    %v151 = vadd.f32 %v149, 1.0
    %v152 = vrcp.pop %v150
    %v153 = vmul.f32 1.0, %v152
    %v154 = vrcp.pop %v151
    %v155 = vmul.f32 1.0, %v154
    %v156 = vtanh.pop %v143
    %158 = vrot.lane.b32.xlu0 %v64, 64
    %v159 = vpop.permute.xlu0 %158
    %v161 = vmul.f32 %v153, %v159
    %163 = vrot.lane.b32.xlu0 %v156, 64
    %v164 = vpop.permute.xlu0 %163
    %v166 = vmul.f32 %v153, %v164
    %168 = vrot.lane.b32.xlu0 %v166, 64
    %v169 = vpop.permute.xlu0 %168
    %v171 = vadd.f32 %v161, %v169
    %v172 = vtanh.pop %v171
    %174 = vrot.lane.b32.xlu0 %v172, 64
    %v175 = vpop.permute.xlu0 %174
    %v177 = vmul.f32 %v155, %v175
    %178 = vst.msk [vmem:[#allocation9] sm:$0xff] %vm67, %v177
    %s179 = scalar_lea.vmem [#allocation4], 16
    %v180 = vld [vmem:[%s179] sm:$0xff]
    %v181 = vld [vmem:[%s179 + $0x8] sm:$0xff]
    %v183 = vsel %vm67, %v177, 0
    %185 = vmatprep.subr.mxu0 0.0
    %186 = vmatpush1.msra.mxu0 0.0
    %187 = vmatprep.subr.mxu0 0.0
    %188 = vmatpush1.msra.mxu0 0.0
    %189 = vmatprep.subr.mxu0 0.0
    %190 = vmatpush1.msra.mxu0 0.0
    %191 = vmatprep.subr.mxu0 0.0
    %192 = vmatpush1.msra.mxu0 0.0
    %193 = vmatprep.subr.mxu0 0.0
    %194 = vmatpush1.msra.mxu0 0.0
    %195 = vmatprep.subr.mxu0 0.0
    %196 = vmatpush1.msra.mxu0 0.0
    %197 = vmatprep.subr.mxu0 0.0
    %198 = vmatpush1.msra.mxu0 0.0
    %199 = vmatprep.subr.mxu0 0.0
    %200 = vmatpush1.msra.mxu0 0.0
    %201 = vmatprep.subr.mxu0 %v62
    %202 = vmatpush1.msra.mxu0 %v61
    %203 = vmatprep.subr.mxu0 %v60
    %204 = vmatpush1.msra.mxu0 %v59
    %205 = vmatprep.subr.mxu0 %v58
    %206 = vmatpush1.msra.mxu0 %v57
    %207 = vmatprep.subr.mxu0 %v56
    %208 = vmatpush1.msra.mxu0 %v55
    %209 = vmatprep.subr.mxu0 %v54
    %210 = vmatpush1.msra.mxu0 %v53
    %211 = vmatprep.subr.mxu0 %v52
    %212 = vmatpush1.msra.mxu0 %v51
    %213 = vmatprep.subr.mxu0 %v50
    %214 = vmatpush1.msra.mxu0 %v49
    %215 = vmatprep.subr.mxu0 %v48
    %216 = vmatpush1.msra.mxu0 %v47
    %217 = vmatprep.subr.mxu0 0.0
    %218 = vmatpush2.msra.mxu0 0.0
    %219 = vmatprep.subr.mxu0 0.0
    %220 = vmatpush2.msra.mxu0 0.0
    %221 = vmatprep.subr.mxu0 0.0
    %222 = vmatpush2.msra.mxu0 0.0
    %223 = vmatprep.subr.mxu0 0.0
    %224 = vmatpush2.msra.mxu0 0.0
    %225 = vmatprep.subr.mxu0 0.0
    %226 = vmatpush2.msra.mxu0 0.0
    %227 = vmatprep.subr.mxu0 0.0
    %228 = vmatpush2.msra.mxu0 0.0
    %229 = vmatprep.subr.mxu0 0.0
    %230 = vmatpush2.msra.mxu0 0.0
    %231 = vmatprep.subr.mxu0 0.0
    %232 = vmatpush2.msra.mxu0 0.0
    %233 = vmatprep.subr.mxu0 0.0
    %234 = vmatpush2.msra.mxu0 0.0
    %235 = vmatprep.subr.mxu0 0.0
    %236 = vmatpush2.msra.mxu0 0.0
    %237 = vmatprep.subr.mxu0 0.0
    %238 = vmatpush2.msra.mxu0 0.0
    %239 = vmatprep.subr.mxu0 0.0
    %240 = vmatpush2.msra.mxu0 0.0
    %241 = vmatprep.subr.mxu0 0.0
    %242 = vmatpush2.msra.mxu0 0.0
    %243 = vmatprep.subr.mxu0 0.0
    %244 = vmatpush2.msra.mxu0 0.0
    %245 = vmatprep.subr.mxu0 0.0
    %246 = vmatpush2.msra.mxu0 0.0
    %247 = vmatprep.subr.mxu0 0.0
    %248 = vmatpush2.msra.mxu0 0.0
    %249 = vmatprep.mubr.f32.mxu0 0.0
    %250 = vmatmul.mubr.f32.gmra.mxu0 %v183
    %v251 = vpop.f32.mrf.mxu0
    %v252 = vadd.f32 0.0, %v251
    %v253 = vpop.f32.mrf.mxu0
    %v254 = vadd.f32 0.0, %v253
    %255 = vdwg.mxu0
    %v256 = vadd.f32 %v180, %v252
    %v257 = vadd.f32 %v181, %v254
    %v258 = vxor.u32 %v256, 2147483648
    %v259 = vxor.u32 %v257, 2147483648
    %v260 = vmul.f32 %v258, 1.442695
    %v261 = vpow.pop %v260
    %v262 = vmul.f32 %v259, 1.442695
    %v263 = vpow.pop %v262
    %v264 = vadd.f32 %v261, 1.0
    %v265 = vadd.f32 %v263, 1.0
    %v266 = vrcp.pop %v264
    %v267 = vmul.f32 1.0, %v266
    %v268 = vrcp.pop %v265
    %v269 = vmul.f32 1.0, %v268
    %v270 = vtanh.pop %v257
    %v271 = vmul.f32 %v267, %v171
    %273 = vrot.lane.b32.xlu0 %v270, 64
    %v274 = vpop.permute.xlu0 %273
    %v276 = vmul.f32 %v267, %v274
    %278 = vrot.lane.b32.xlu0 %v276, 64
    %v279 = vpop.permute.xlu0 %278
    %v281 = vadd.f32 %v271, %v279
    %v282 = vtanh.pop %v281
    %284 = vrot.lane.b32.xlu0 %v282, 64
    %v285 = vpop.permute.xlu0 %284
    %v287 = vmul.f32 %v269, %v285
    %s288 = scalar_lea.vmem [#allocation9], 8
    %289 = vst.msk [vmem:[%s288] sm:$0xff] %vm67, %v287
    %s290 = scalar_lea.vmem [#allocation4], 32
    %v291 = vld [vmem:[%s290] sm:$0xff]
    %v292 = vld [vmem:[%s290 + $0x8] sm:$0xff]
    %v294 = vsel %vm67, %v287, 0
    %296 = vmatprep.subr.mxu0 0.0
    %297 = vmatpush1.msra.mxu0 0.0
    %298 = vmatprep.subr.mxu0 0.0
    %299 = vmatpush1.msra.mxu0 0.0
    %300 = vmatprep.subr.mxu0 0.0
    %301 = vmatpush1.msra.mxu0 0.0
    %302 = vmatprep.subr.mxu0 0.0
    %303 = vmatpush1.msra.mxu0 0.0
    %304 = vmatprep.subr.mxu0 0.0
    %305 = vmatpush1.msra.mxu0 0.0
    %306 = vmatprep.subr.mxu0 0.0
    %307 = vmatpush1.msra.mxu0 0.0
    %308 = vmatprep.subr.mxu0 0.0
    %309 = vmatpush1.msra.mxu0 0.0
    %310 = vmatprep.subr.mxu0 0.0
    %311 = vmatpush1.msra.mxu0 0.0
    %312 = vmatprep.subr.mxu0 %v62
    %313 = vmatpush1.msra.mxu0 %v61
    %314 = vmatprep.subr.mxu0 %v60
    %315 = vmatpush1.msra.mxu0 %v59
    %316 = vmatprep.subr.mxu0 %v58
    %317 = vmatpush1.msra.mxu0 %v57
    %318 = vmatprep.subr.mxu0 %v56
    %319 = vmatpush1.msra.mxu0 %v55
    %320 = vmatprep.subr.mxu0 %v54
    %321 = vmatpush1.msra.mxu0 %v53
    %322 = vmatprep.subr.mxu0 %v52
    %323 = vmatpush1.msra.mxu0 %v51
    %324 = vmatprep.subr.mxu0 %v50
    %325 = vmatpush1.msra.mxu0 %v49
    %326 = vmatprep.subr.mxu0 %v48
    %327 = vmatpush1.msra.mxu0 %v47
    %328 = vmatprep.subr.mxu0 0.0
    %329 = vmatpush2.msra.mxu0 0.0
    %330 = vmatprep.subr.mxu0 0.0
    %331 = vmatpush2.msra.mxu0 0.0
    %332 = vmatprep.subr.mxu0 0.0
    %333 = vmatpush2.msra.mxu0 0.0
    %334 = vmatprep.subr.mxu0 0.0
    %335 = vmatpush2.msra.mxu0 0.0
    %336 = vmatprep.subr.mxu0 0.0
    %337 = vmatpush2.msra.mxu0 0.0
    %338 = vmatprep.subr.mxu0 0.0
    %339 = vmatpush2.msra.mxu0 0.0
    %340 = vmatprep.subr.mxu0 0.0
    %341 = vmatpush2.msra.mxu0 0.0
    %342 = vmatprep.subr.mxu0 0.0
    %343 = vmatpush2.msra.mxu0 0.0
    %344 = vmatprep.subr.mxu0 0.0
    %345 = vmatpush2.msra.mxu0 0.0
    %346 = vmatprep.subr.mxu0 0.0
    %347 = vmatpush2.msra.mxu0 0.0
    %348 = vmatprep.subr.mxu0 0.0
    %349 = vmatpush2.msra.mxu0 0.0
    %350 = vmatprep.subr.mxu0 0.0
    %351 = vmatpush2.msra.mxu0 0.0
    %352 = vmatprep.subr.mxu0 0.0
    %353 = vmatpush2.msra.mxu0 0.0
    %354 = vmatprep.subr.mxu0 0.0
    %355 = vmatpush2.msra.mxu0 0.0
    %356 = vmatprep.subr.mxu0 0.0
    %357 = vmatpush2.msra.mxu0 0.0
    %358 = vmatprep.subr.mxu0 0.0
    %359 = vmatpush2.msra.mxu0 0.0
    %360 = vmatprep.mubr.f32.mxu0 0.0
    %361 = vmatmul.mubr.f32.gmra.mxu0 %v294
    %v362 = vpop.f32.mrf.mxu0
    %v363 = vadd.f32 0.0, %v362
    %v364 = vpop.f32.mrf.mxu0
    %v365 = vadd.f32 0.0, %v364
    %366 = vdwg.mxu0
    %v367 = vadd.f32 %v291, %v363
    %v368 = vadd.f32 %v292, %v365
    %v369 = vxor.u32 %v367, 2147483648
    %v370 = vxor.u32 %v368, 2147483648
    %v371 = vmul.f32 %v369, 1.442695
    %v372 = vpow.pop %v371
    %v373 = vmul.f32 %v370, 1.442695
    %v374 = vpow.pop %v373
    %v375 = vadd.f32 %v372, 1.0
    %v376 = vadd.f32 %v374, 1.0
    %v377 = vrcp.pop %v375
    %v378 = vmul.f32 1.0, %v377
    %v379 = vrcp.pop %v376
    %v380 = vmul.f32 1.0, %v379
    %v381 = vtanh.pop %v368
    %v382 = vmul.f32 %v378, %v281
    %384 = vrot.lane.b32.xlu0 %v381, 64
    %v385 = vpop.permute.xlu0 %384
    %v387 = vmul.f32 %v378, %v385
    %389 = vrot.lane.b32.xlu0 %v387, 64
    %v390 = vpop.permute.xlu0 %389
    %v392 = vadd.f32 %v382, %v390
    %v393 = vtanh.pop %v392
    %395 = vrot.lane.b32.xlu0 %v393, 64
    %v396 = vpop.permute.xlu0 %395
    %v398 = vmul.f32 %v380, %v396
    %s399 = scalar_lea.vmem [#allocation9], 16
    %400 = vst.msk [vmem:[%s399] sm:$0xff] %vm67, %v398
    %s401 = scalar_lea.vmem [#allocation4], 48
    %v402 = vld [vmem:[%s401] sm:$0xff]
    %v403 = vld [vmem:[%s401 + $0x8] sm:$0xff]
    %v405 = vsel %vm67, %v398, 0
    %407 = vmatprep.subr.mxu0 0.0
    %408 = vmatpush1.msra.mxu0 0.0
    %409 = vmatprep.subr.mxu0 0.0
    %410 = vmatpush1.msra.mxu0 0.0
    %411 = vmatprep.subr.mxu0 0.0
    %412 = vmatpush1.msra.mxu0 0.0
    %413 = vmatprep.subr.mxu0 0.0
    %414 = vmatpush1.msra.mxu0 0.0
    %415 = vmatprep.subr.mxu0 0.0
    %416 = vmatpush1.msra.mxu0 0.0
    %417 = vmatprep.subr.mxu0 0.0
    %418 = vmatpush1.msra.mxu0 0.0
    %419 = vmatprep.subr.mxu0 0.0
    %420 = vmatpush1.msra.mxu0 0.0
    %421 = vmatprep.subr.mxu0 0.0
    %422 = vmatpush1.msra.mxu0 0.0
    %423 = vmatprep.subr.mxu0 %v62
    %424 = vmatpush1.msra.mxu0 %v61
    %425 = vmatprep.subr.mxu0 %v60
    %426 = vmatpush1.msra.mxu0 %v59
    %427 = vmatprep.subr.mxu0 %v58
    %428 = vmatpush1.msra.mxu0 %v57
    %429 = vmatprep.subr.mxu0 %v56
    %430 = vmatpush1.msra.mxu0 %v55
    %431 = vmatprep.subr.mxu0 %v54
    %432 = vmatpush1.msra.mxu0 %v53
    %433 = vmatprep.subr.mxu0 %v52
    %434 = vmatpush1.msra.mxu0 %v51
    %435 = vmatprep.subr.mxu0 %v50
    %436 = vmatpush1.msra.mxu0 %v49
    %437 = vmatprep.subr.mxu0 %v48
    %438 = vmatpush1.msra.mxu0 %v47
    %439 = vmatprep.subr.mxu0 0.0
    %440 = vmatpush2.msra.mxu0 0.0
    %441 = vmatprep.subr.mxu0 0.0
    %442 = vmatpush2.msra.mxu0 0.0
    %443 = vmatprep.subr.mxu0 0.0
    %444 = vmatpush2.msra.mxu0 0.0
    %445 = vmatprep.subr.mxu0 0.0
    %446 = vmatpush2.msra.mxu0 0.0
    %447 = vmatprep.subr.mxu0 0.0
    %448 = vmatpush2.msra.mxu0 0.0
    %449 = vmatprep.subr.mxu0 0.0
    %450 = vmatpush2.msra.mxu0 0.0
    %451 = vmatprep.subr.mxu0 0.0
    %452 = vmatpush2.msra.mxu0 0.0
    %453 = vmatprep.subr.mxu0 0.0
    %454 = vmatpush2.msra.mxu0 0.0
    %455 = vmatprep.subr.mxu0 0.0
    %456 = vmatpush2.msra.mxu0 0.0
    %457 = vmatprep.subr.mxu0 0.0
    %458 = vmatpush2.msra.mxu0 0.0
    %459 = vmatprep.subr.mxu0 0.0
    %460 = vmatpush2.msra.mxu0 0.0
    %461 = vmatprep.subr.mxu0 0.0
    %462 = vmatpush2.msra.mxu0 0.0
    %463 = vmatprep.subr.mxu0 0.0
    %464 = vmatpush2.msra.mxu0 0.0
    %465 = vmatprep.subr.mxu0 0.0
    %466 = vmatpush2.msra.mxu0 0.0
    %467 = vmatprep.subr.mxu0 0.0
    %468 = vmatpush2.msra.mxu0 0.0
    %469 = vmatprep.subr.mxu0 0.0
    %470 = vmatpush2.msra.mxu0 0.0
    %471 = vmatprep.mubr.f32.mxu0 0.0
    %472 = vmatmul.mubr.f32.gmra.mxu0 %v405
    %v473 = vpop.f32.mrf.mxu0
    %v474 = vadd.f32 0.0, %v473
    %v475 = vpop.f32.mrf.mxu0
    %v476 = vadd.f32 0.0, %v475
    %477 = vdwg.mxu0
    %v478 = vadd.f32 %v402, %v474
    %v479 = vadd.f32 %v403, %v476
    %v480 = vxor.u32 %v478, 2147483648
    %v481 = vxor.u32 %v479, 2147483648
    %v482 = vmul.f32 %v480, 1.442695
    %v483 = vpow.pop %v482
    %v484 = vmul.f32 %v481, 1.442695
    %v485 = vpow.pop %v484
    %v486 = vadd.f32 %v483, 1.0
    %v487 = vadd.f32 %v485, 1.0
    %v488 = vrcp.pop %v486
    %v489 = vmul.f32 1.0, %v488
    %v490 = vrcp.pop %v487
    %v491 = vmul.f32 1.0, %v490
    %v492 = vtanh.pop %v479
    %v493 = vmul.f32 %v489, %v392
    %495 = vrot.lane.b32.xlu0 %v492, 64
    %v496 = vpop.permute.xlu0 %495
    %v498 = vmul.f32 %v489, %v496
    %500 = vrot.lane.b32.xlu0 %v498, 64
    %v501 = vpop.permute.xlu0 %500
    %v503 = vadd.f32 %v493, %v501
    %v504 = vtanh.pop %v503
    %506 = vrot.lane.b32.xlu0 %v504, 64
    %v507 = vpop.permute.xlu0 %506
    %v509 = vmul.f32 %v491, %v507
    %s510 = scalar_lea.vmem [#allocation9], 24
    %511 = vst.msk [vmem:[%s510] sm:$0xff] %vm67, %v509
    %s512 = scalar_lea.vmem [#allocation4], 64
    %v513 = vld [vmem:[%s512] sm:$0xff]
    %v514 = vld [vmem:[%s512 + $0x8] sm:$0xff]
    %v516 = vsel %vm67, %v509, 0
    %518 = vmatprep.subr.mxu0 0.0
    %519 = vmatpush1.msra.mxu0 0.0
    %520 = vmatprep.subr.mxu0 0.0
    %521 = vmatpush1.msra.mxu0 0.0
    %522 = vmatprep.subr.mxu0 0.0
    %523 = vmatpush1.msra.mxu0 0.0
    %524 = vmatprep.subr.mxu0 0.0
    %525 = vmatpush1.msra.mxu0 0.0
    %526 = vmatprep.subr.mxu0 0.0
    %527 = vmatpush1.msra.mxu0 0.0
    %528 = vmatprep.subr.mxu0 0.0
    %529 = vmatpush1.msra.mxu0 0.0
    %530 = vmatprep.subr.mxu0 0.0
    %531 = vmatpush1.msra.mxu0 0.0
    %532 = vmatprep.subr.mxu0 0.0
    %533 = vmatpush1.msra.mxu0 0.0
    %534 = vmatprep.subr.mxu0 %v62
    %535 = vmatpush1.msra.mxu0 %v61
    %536 = vmatprep.subr.mxu0 %v60
    %537 = vmatpush1.msra.mxu0 %v59
    %538 = vmatprep.subr.mxu0 %v58
    %539 = vmatpush1.msra.mxu0 %v57
    %540 = vmatprep.subr.mxu0 %v56
    %541 = vmatpush1.msra.mxu0 %v55
    %542 = vmatprep.subr.mxu0 %v54
    %543 = vmatpush1.msra.mxu0 %v53
    %544 = vmatprep.subr.mxu0 %v52
    %545 = vmatpush1.msra.mxu0 %v51
    %546 = vmatprep.subr.mxu0 %v50
    %547 = vmatpush1.msra.mxu0 %v49
    %548 = vmatprep.subr.mxu0 %v48
    %549 = vmatpush1.msra.mxu0 %v47
    %550 = vmatprep.subr.mxu0 0.0
    %551 = vmatpush2.msra.mxu0 0.0
    %552 = vmatprep.subr.mxu0 0.0
    %553 = vmatpush2.msra.mxu0 0.0
    %554 = vmatprep.subr.mxu0 0.0
    %555 = vmatpush2.msra.mxu0 0.0
    %556 = vmatprep.subr.mxu0 0.0
    %557 = vmatpush2.msra.mxu0 0.0
    %558 = vmatprep.subr.mxu0 0.0
    %559 = vmatpush2.msra.mxu0 0.0
    %560 = vmatprep.subr.mxu0 0.0
    %561 = vmatpush2.msra.mxu0 0.0
    %562 = vmatprep.subr.mxu0 0.0
    %563 = vmatpush2.msra.mxu0 0.0
    %564 = vmatprep.subr.mxu0 0.0
    %565 = vmatpush2.msra.mxu0 0.0
    %566 = vmatprep.subr.mxu0 0.0
    %567 = vmatpush2.msra.mxu0 0.0
    %568 = vmatprep.subr.mxu0 0.0
    %569 = vmatpush2.msra.mxu0 0.0
    %570 = vmatprep.subr.mxu0 0.0
    %571 = vmatpush2.msra.mxu0 0.0
    %572 = vmatprep.subr.mxu0 0.0
    %573 = vmatpush2.msra.mxu0 0.0
    %574 = vmatprep.subr.mxu0 0.0
    %575 = vmatpush2.msra.mxu0 0.0
    %576 = vmatprep.subr.mxu0 0.0
    %577 = vmatpush2.msra.mxu0 0.0
    %578 = vmatprep.subr.mxu0 0.0
    %579 = vmatpush2.msra.mxu0 0.0
    %580 = vmatprep.subr.mxu0 0.0
    %581 = vmatpush2.msra.mxu0 0.0
    %582 = vmatprep.mubr.f32.mxu0 0.0
    %583 = vmatmul.mubr.f32.gmra.mxu0 %v516
    %v584 = vpop.f32.mrf.mxu0
    %v585 = vadd.f32 0.0, %v584
    %v586 = vpop.f32.mrf.mxu0
    %v587 = vadd.f32 0.0, %v586
    %588 = vdwg.mxu0
    %v589 = vadd.f32 %v513, %v585
    %v590 = vadd.f32 %v514, %v587
    %v591 = vxor.u32 %v589, 2147483648
    %v592 = vxor.u32 %v590, 2147483648
    %v593 = vmul.f32 %v591, 1.442695
    %v594 = vpow.pop %v593
    %v595 = vmul.f32 %v592, 1.442695
    %v596 = vpow.pop %v595
    %v597 = vadd.f32 %v594, 1.0
    %v598 = vadd.f32 %v596, 1.0
    %v599 = vrcp.pop %v597
    %v600 = vmul.f32 1.0, %v599
    %v601 = vrcp.pop %v598
    %v602 = vmul.f32 1.0, %v601
    %v603 = vtanh.pop %v590
    %v604 = vmul.f32 %v600, %v503
    %606 = vrot.lane.b32.xlu0 %v603, 64
    %v607 = vpop.permute.xlu0 %606
    %v609 = vmul.f32 %v600, %v607
    %611 = vrot.lane.b32.xlu0 %v609, 64
    %v612 = vpop.permute.xlu0 %611
    %v614 = vadd.f32 %v604, %v612
    %v615 = vtanh.pop %v614
    %617 = vrot.lane.b32.xlu0 %v615, 64
    %v618 = vpop.permute.xlu0 %617
    %v620 = vmul.f32 %v602, %v618
    %s621 = scalar_lea.vmem [#allocation9], 32
    %622 = vst.msk [vmem:[%s621] sm:$0xff] %vm67, %v620
    %s623 = scalar_lea.vmem [#allocation4], 80
    %v624 = vld [vmem:[%s623] sm:$0xff]
    %v625 = vld [vmem:[%s623 + $0x8] sm:$0xff]
    %v627 = vsel %vm67, %v620, 0
    %629 = vmatprep.subr.mxu0 0.0
    %630 = vmatpush1.msra.mxu0 0.0
    %631 = vmatprep.subr.mxu0 0.0
    %632 = vmatpush1.msra.mxu0 0.0
    %633 = vmatprep.subr.mxu0 0.0
    %634 = vmatpush1.msra.mxu0 0.0
    %635 = vmatprep.subr.mxu0 0.0
    %636 = vmatpush1.msra.mxu0 0.0
    %637 = vmatprep.subr.mxu0 0.0
    %638 = vmatpush1.msra.mxu0 0.0
    %639 = vmatprep.subr.mxu0 0.0
    %640 = vmatpush1.msra.mxu0 0.0
    %641 = vmatprep.subr.mxu0 0.0
    %642 = vmatpush1.msra.mxu0 0.0
    %643 = vmatprep.subr.mxu0 0.0
    %644 = vmatpush1.msra.mxu0 0.0
    %645 = vmatprep.subr.mxu0 %v62
    %646 = vmatpush1.msra.mxu0 %v61
    %647 = vmatprep.subr.mxu0 %v60
    %648 = vmatpush1.msra.mxu0 %v59
    %649 = vmatprep.subr.mxu0 %v58
    %650 = vmatpush1.msra.mxu0 %v57
    %651 = vmatprep.subr.mxu0 %v56
    %652 = vmatpush1.msra.mxu0 %v55
    %653 = vmatprep.subr.mxu0 %v54
    %654 = vmatpush1.msra.mxu0 %v53
    %655 = vmatprep.subr.mxu0 %v52
    %656 = vmatpush1.msra.mxu0 %v51
    %657 = vmatprep.subr.mxu0 %v50
    %658 = vmatpush1.msra.mxu0 %v49
    %659 = vmatprep.subr.mxu0 %v48
    %660 = vmatpush1.msra.mxu0 %v47
    %661 = vmatprep.subr.mxu0 0.0
    %662 = vmatpush2.msra.mxu0 0.0
    %663 = vmatprep.subr.mxu0 0.0
    %664 = vmatpush2.msra.mxu0 0.0
    %665 = vmatprep.subr.mxu0 0.0
    %666 = vmatpush2.msra.mxu0 0.0
    %667 = vmatprep.subr.mxu0 0.0
    %668 = vmatpush2.msra.mxu0 0.0
    %669 = vmatprep.subr.mxu0 0.0
    %670 = vmatpush2.msra.mxu0 0.0
    %671 = vmatprep.subr.mxu0 0.0
    %672 = vmatpush2.msra.mxu0 0.0
    %673 = vmatprep.subr.mxu0 0.0
    %674 = vmatpush2.msra.mxu0 0.0
    %675 = vmatprep.subr.mxu0 0.0
    %676 = vmatpush2.msra.mxu0 0.0
    %677 = vmatprep.subr.mxu0 0.0
    %678 = vmatpush2.msra.mxu0 0.0
    %679 = vmatprep.subr.mxu0 0.0
    %680 = vmatpush2.msra.mxu0 0.0
    %681 = vmatprep.subr.mxu0 0.0
    %682 = vmatpush2.msra.mxu0 0.0
    %683 = vmatprep.subr.mxu0 0.0
    %684 = vmatpush2.msra.mxu0 0.0
    %685 = vmatprep.subr.mxu0 0.0
    %686 = vmatpush2.msra.mxu0 0.0
    %687 = vmatprep.subr.mxu0 0.0
    %688 = vmatpush2.msra.mxu0 0.0
    %689 = vmatprep.subr.mxu0 0.0
    %690 = vmatpush2.msra.mxu0 0.0
    %691 = vmatprep.subr.mxu0 0.0
    %692 = vmatpush2.msra.mxu0 0.0
    %693 = vmatprep.mubr.f32.mxu0 0.0
    %694 = vmatmul.mubr.f32.gmra.mxu0 %v627
    %v695 = vpop.f32.mrf.mxu0
    %v696 = vadd.f32 0.0, %v695
    %v697 = vpop.f32.mrf.mxu0
    %v698 = vadd.f32 0.0, %v697
    %699 = vdwg.mxu0
    %v700 = vadd.f32 %v624, %v696
    %v701 = vadd.f32 %v625, %v698
    %v702 = vxor.u32 %v700, 2147483648
    %v703 = vxor.u32 %v701, 2147483648
    %v704 = vmul.f32 %v702, 1.442695
    %v705 = vpow.pop %v704
    %v706 = vmul.f32 %v703, 1.442695
    %v707 = vpow.pop %v706
    %v708 = vadd.f32 %v705, 1.0
    %v709 = vadd.f32 %v707, 1.0
    %v710 = vrcp.pop %v708
    %v711 = vmul.f32 1.0, %v710
    %v712 = vrcp.pop %v709
    %v713 = vmul.f32 1.0, %v712
    %v714 = vtanh.pop %v701
    %v715 = vmul.f32 %v711, %v614
    %717 = vrot.lane.b32.xlu0 %v714, 64
    %v718 = vpop.permute.xlu0 %717
    %v720 = vmul.f32 %v711, %v718
    %722 = vrot.lane.b32.xlu0 %v720, 64
    %v723 = vpop.permute.xlu0 %722
    %v725 = vadd.f32 %v715, %v723
    %v726 = vtanh.pop %v725
    %728 = vrot.lane.b32.xlu0 %v726, 64
    %v729 = vpop.permute.xlu0 %728
    %v731 = vmul.f32 %v713, %v729
    %s732 = scalar_lea.vmem [#allocation9], 40
    %733 = vst.msk [vmem:[%s732] sm:$0xff] %vm67, %v731
    %s734 = scalar_lea.vmem [#allocation4], 96
    %v735 = vld [vmem:[%s734] sm:$0xff]
    %v736 = vld [vmem:[%s734 + $0x8] sm:$0xff]
    %v738 = vsel %vm67, %v731, 0
    %740 = vmatprep.subr.mxu0 0.0
    %741 = vmatpush1.msra.mxu0 0.0
    %742 = vmatprep.subr.mxu0 0.0
    %743 = vmatpush1.msra.mxu0 0.0
    %744 = vmatprep.subr.mxu0 0.0
    %745 = vmatpush1.msra.mxu0 0.0
    %746 = vmatprep.subr.mxu0 0.0
    %747 = vmatpush1.msra.mxu0 0.0
    %748 = vmatprep.subr.mxu0 0.0
    %749 = vmatpush1.msra.mxu0 0.0
    %750 = vmatprep.subr.mxu0 0.0
    %751 = vmatpush1.msra.mxu0 0.0
    %752 = vmatprep.subr.mxu0 0.0
    %753 = vmatpush1.msra.mxu0 0.0
    %754 = vmatprep.subr.mxu0 0.0
    %755 = vmatpush1.msra.mxu0 0.0
    %756 = vmatprep.subr.mxu0 %v62
    %757 = vmatpush1.msra.mxu0 %v61
    %758 = vmatprep.subr.mxu0 %v60
    %759 = vmatpush1.msra.mxu0 %v59
    %760 = vmatprep.subr.mxu0 %v58
    %761 = vmatpush1.msra.mxu0 %v57
    %762 = vmatprep.subr.mxu0 %v56
    %763 = vmatpush1.msra.mxu0 %v55
    %764 = vmatprep.subr.mxu0 %v54
    %765 = vmatpush1.msra.mxu0 %v53
    %766 = vmatprep.subr.mxu0 %v52
    %767 = vmatpush1.msra.mxu0 %v51
    %768 = vmatprep.subr.mxu0 %v50
    %769 = vmatpush1.msra.mxu0 %v49
    %770 = vmatprep.subr.mxu0 %v48
    %771 = vmatpush1.msra.mxu0 %v47
    %772 = vmatprep.subr.mxu0 0.0
    %773 = vmatpush2.msra.mxu0 0.0
    %774 = vmatprep.subr.mxu0 0.0
    %775 = vmatpush2.msra.mxu0 0.0
    %776 = vmatprep.subr.mxu0 0.0
    %777 = vmatpush2.msra.mxu0 0.0
    %778 = vmatprep.subr.mxu0 0.0
    %779 = vmatpush2.msra.mxu0 0.0
    %780 = vmatprep.subr.mxu0 0.0
    %781 = vmatpush2.msra.mxu0 0.0
    %782 = vmatprep.subr.mxu0 0.0
    %783 = vmatpush2.msra.mxu0 0.0
    %784 = vmatprep.subr.mxu0 0.0
    %785 = vmatpush2.msra.mxu0 0.0
    %786 = vmatprep.subr.mxu0 0.0
    %787 = vmatpush2.msra.mxu0 0.0
    %788 = vmatprep.subr.mxu0 0.0
    %789 = vmatpush2.msra.mxu0 0.0
    %790 = vmatprep.subr.mxu0 0.0
    %791 = vmatpush2.msra.mxu0 0.0
    %792 = vmatprep.subr.mxu0 0.0
    %793 = vmatpush2.msra.mxu0 0.0
    %794 = vmatprep.subr.mxu0 0.0
    %795 = vmatpush2.msra.mxu0 0.0
    %796 = vmatprep.subr.mxu0 0.0
    %797 = vmatpush2.msra.mxu0 0.0
    %798 = vmatprep.subr.mxu0 0.0
    %799 = vmatpush2.msra.mxu0 0.0
    %800 = vmatprep.subr.mxu0 0.0
    %801 = vmatpush2.msra.mxu0 0.0
    %802 = vmatprep.subr.mxu0 0.0
    %803 = vmatpush2.msra.mxu0 0.0
    %804 = vmatprep.mubr.f32.mxu0 0.0
    %805 = vmatmul.mubr.f32.gmra.mxu0 %v738
    %v806 = vpop.f32.mrf.mxu0
    %v807 = vadd.f32 0.0, %v806
    %v808 = vpop.f32.mrf.mxu0
    %v809 = vadd.f32 0.0, %v808
    %810 = vdwg.mxu0
    %v811 = vadd.f32 %v735, %v807
    %v812 = vadd.f32 %v736, %v809
    %v813 = vxor.u32 %v811, 2147483648
    %v814 = vxor.u32 %v812, 2147483648
    %v815 = vmul.f32 %v813, 1.442695
    %v816 = vpow.pop %v815
    %v817 = vmul.f32 %v814, 1.442695
    %v818 = vpow.pop %v817
    %v819 = vadd.f32 %v816, 1.0
    %v820 = vadd.f32 %v818, 1.0
    %v821 = vrcp.pop %v819
    %v822 = vmul.f32 1.0, %v821
    %v823 = vrcp.pop %v820
    %v824 = vmul.f32 1.0, %v823
    %v825 = vtanh.pop %v812
    %v826 = vmul.f32 %v822, %v725
    %828 = vrot.lane.b32.xlu0 %v825, 64
    %v829 = vpop.permute.xlu0 %828
    %v831 = vmul.f32 %v822, %v829
    %833 = vrot.lane.b32.xlu0 %v831, 64
    %v834 = vpop.permute.xlu0 %833
    %v836 = vadd.f32 %v826, %v834
    %v837 = vtanh.pop %v836
    %839 = vrot.lane.b32.xlu0 %v837, 64
    %v840 = vpop.permute.xlu0 %839
    %v842 = vmul.f32 %v824, %v840
    %s843 = scalar_lea.vmem [#allocation9], 48
    %844 = vst.msk [vmem:[%s843] sm:$0xff] %vm67, %v842
    %s845 = scalar_lea.vmem [#allocation4], 112
    %v846 = vld [vmem:[%s845] sm:$0xff]
    %v847 = vld [vmem:[%s845 + $0x8] sm:$0xff]
    %v849 = vsel %vm67, %v842, 0
    %851 = vmatprep.subr.mxu0 0.0
    %852 = vmatpush1.msra.mxu0 0.0
    %853 = vmatprep.subr.mxu0 0.0
    %854 = vmatpush1.msra.mxu0 0.0
    %855 = vmatprep.subr.mxu0 0.0
    %856 = vmatpush1.msra.mxu0 0.0
    %857 = vmatprep.subr.mxu0 0.0
    %858 = vmatpush1.msra.mxu0 0.0
    %859 = vmatprep.subr.mxu0 0.0
    %860 = vmatpush1.msra.mxu0 0.0
    %861 = vmatprep.subr.mxu0 0.0
    %862 = vmatpush1.msra.mxu0 0.0
    %863 = vmatprep.subr.mxu0 0.0
    %864 = vmatpush1.msra.mxu0 0.0
    %865 = vmatprep.subr.mxu0 0.0
    %866 = vmatpush1.msra.mxu0 0.0
    %867 = vmatprep.subr.mxu0 %v62
    %868 = vmatpush1.msra.mxu0 %v61
    %869 = vmatprep.subr.mxu0 %v60
    %870 = vmatpush1.msra.mxu0 %v59
    %871 = vmatprep.subr.mxu0 %v58
    %872 = vmatpush1.msra.mxu0 %v57
    %873 = vmatprep.subr.mxu0 %v56
    %874 = vmatpush1.msra.mxu0 %v55
    %875 = vmatprep.subr.mxu0 %v54
    %876 = vmatpush1.msra.mxu0 %v53
    %877 = vmatprep.subr.mxu0 %v52
    %878 = vmatpush1.msra.mxu0 %v51
    %879 = vmatprep.subr.mxu0 %v50
    %880 = vmatpush1.msra.mxu0 %v49
    %881 = vmatprep.subr.mxu0 %v48
    %882 = vmatpush1.msra.mxu0 %v47
    %883 = vmatprep.subr.mxu0 0.0
    %884 = vmatpush2.msra.mxu0 0.0
    %885 = vmatprep.subr.mxu0 0.0
    %886 = vmatpush2.msra.mxu0 0.0
    %887 = vmatprep.subr.mxu0 0.0
    %888 = vmatpush2.msra.mxu0 0.0
    %889 = vmatprep.subr.mxu0 0.0
    %890 = vmatpush2.msra.mxu0 0.0
    %891 = vmatprep.subr.mxu0 0.0
    %892 = vmatpush2.msra.mxu0 0.0
    %893 = vmatprep.subr.mxu0 0.0
    %894 = vmatpush2.msra.mxu0 0.0
    %895 = vmatprep.subr.mxu0 0.0
    %896 = vmatpush2.msra.mxu0 0.0
    %897 = vmatprep.subr.mxu0 0.0
    %898 = vmatpush2.msra.mxu0 0.0
    %899 = vmatprep.subr.mxu0 0.0
    %900 = vmatpush2.msra.mxu0 0.0
    %901 = vmatprep.subr.mxu0 0.0
    %902 = vmatpush2.msra.mxu0 0.0
    %903 = vmatprep.subr.mxu0 0.0
    %904 = vmatpush2.msra.mxu0 0.0
    %905 = vmatprep.subr.mxu0 0.0
    %906 = vmatpush2.msra.mxu0 0.0
    %907 = vmatprep.subr.mxu0 0.0
    %908 = vmatpush2.msra.mxu0 0.0
    %909 = vmatprep.subr.mxu0 0.0
    %910 = vmatpush2.msra.mxu0 0.0
    %911 = vmatprep.subr.mxu0 0.0
    %912 = vmatpush2.msra.mxu0 0.0
    %913 = vmatprep.subr.mxu0 0.0
    %914 = vmatpush2.msra.mxu0 0.0
    %915 = vmatprep.mubr.f32.mxu0 0.0
    %916 = vmatmul.mubr.f32.gmra.mxu0 %v849
    %v917 = vpop.f32.mrf.mxu0
    %v918 = vadd.f32 0.0, %v917
    %v919 = vpop.f32.mrf.mxu0
    %v920 = vadd.f32 0.0, %v919
    %921 = vdwg.mxu0
    %v922 = vadd.f32 %v846, %v918
    %v923 = vadd.f32 %v847, %v920
    %v924 = vxor.u32 %v922, 2147483648
    %v925 = vxor.u32 %v923, 2147483648
    %v926 = vmul.f32 %v924, 1.442695
    %v927 = vpow.pop %v926
    %v928 = vmul.f32 %v925, 1.442695
    %v929 = vpow.pop %v928
    %v930 = vadd.f32 %v927, 1.0
    %v931 = vadd.f32 %v929, 1.0
    %v932 = vrcp.pop %v930
    %v933 = vmul.f32 1.0, %v932
    %v934 = vrcp.pop %v931
    %v935 = vmul.f32 1.0, %v934
    %v936 = vtanh.pop %v923
    %v937 = vmul.f32 %v933, %v836
    %939 = vrot.lane.b32.xlu0 %v936, 64
    %v940 = vpop.permute.xlu0 %939
    %v942 = vmul.f32 %v933, %v940
    %944 = vrot.lane.b32.xlu0 %v942, 64
    %v945 = vpop.permute.xlu0 %944
    %v947 = vadd.f32 %v937, %v945
    %v948 = vtanh.pop %v947
    %950 = vrot.lane.b32.xlu0 %v948, 64
    %v951 = vpop.permute.xlu0 %950
    %v953 = vmul.f32 %v935, %v951
    %s954 = scalar_lea.vmem [#allocation9], 56
    %955 = vst.msk [vmem:[%s954] sm:$0xff] %vm67, %v953
    %956 = vst.msk [vmem:[#allocation2] sm:$0xff] %vm67, %v953
    %958 = vrot.lane.b32.xlu0 %v947, 64
    %v959 = vpop.permute.xlu0 %958
    %961 = vst.msk [vmem:[#allocation3] sm:$0xff] %vm67, %v959
    // Predicated region
    $region22: #{tpu_custom_call.1} parent=1 // pred_check
      _
    $region23: #{tpu_custom_call.1} parent=1 // pred_check_branch
      %963 = sbr.rel (0) target = $region25
    $region24: #{tpu_custom_call.1} parent=1 // pred_region
      %s965 = ssub.s32 1024, 1024
      %966 = vsyncadd [#allocation6], %s965
      %s967 = sshll.u32 [#allocation9], 4
      %s968 = int_to_ptr.vmem [resolvable:$true] %s967
      %973 = dma.vmem_to_hbm [thread:$0]  %s968, 1024, %s2, [#allocation6], 128, 128, 8
    $region25: #{tpu_custom_call.1} parent=1 // pred_fallthru
      _
    // Predicated region
    $region26: #{tpu_custom_call.1} parent=1 // pred_check
      _
    $region27: #{tpu_custom_call.1} parent=1 // pred_check_branch
      %975 = sbr.rel (0) target = $region29
    $region28: #{tpu_custom_call.1} parent=1 // pred_region
      %976 = dma.done [#allocation6], 1024
    $region29: #{tpu_custom_call.1} parent=1 // pred_fallthru
      _
    %977 = vsyncpa [#allocation5], 1
    %978 = vsyncpa [#allocation8], 1
    %979 = vsyncpa [#allocation6], 1

</llo_original>
